<compile_context>
chip_gen: v7x
topology: tpu7x:2x2x1
jax: 0.10.0
libtpu: 0.0.40
codegen_flags: <defaults>
</compile_context>

<pallas_src>
import jax
import jax.numpy as jnp
from jax.experimental import pallas as pl
from jax.experimental.pallas import tpu as pltpu


def _copy_kernel(x_ref, o_ref):
    # BaseModel has no parameters and an abstract forward: base-class
    # semantics reduce to passing the input through unchanged.
    o_ref[...] = x_ref[...]


_MiB = 1024 * 1024

# Inputs at or below this take the no-grid single-block path; larger inputs go
# through the pipelined, megacore-shardable tiled path (kept small so v7x's
# two TensorCores get a multi-step grid to split).
_SINGLE_BLOCK_CUTOFF = 4 * _MiB

# Lane widths tried for the lane-dense reshape (largest first).
_LANE_CANDIDATES = (4096, 2048, 1024, 512, 256, 128)


def _min_sublane(dtype):
    # (8,128) tiling rule scales with packing: f32 -> 8, bf16 -> 16, int8 -> 32.
    itemsize = jnp.dtype(dtype).itemsize
    return (4 // max(1, itemsize)) * 8


def _vmem_budget_bytes():
    """Returns (working-set budget for the 4 live tiles, vmem_limit_bytes)."""
    try:
        cap = int(pltpu.get_tpu_info().vmem_capacity_bytes)
    except Exception:  # interpret mode / info unavailable
        cap = 64 * _MiB
    # ~5/8 of physical VMEM, capped at 48 MiB:
    #   v5e/v6e (128 MiB) -> 48 MiB, v7x (64 MiB/TC) -> 40 MiB.
    budget = min(48 * _MiB, (cap * 5) // 8)
    vmem_limit = min(cap, budget + 4 * _MiB)
    return budget, vmem_limit


def _choose_lane_width(total):
    for lane in _LANE_CANDIDATES:
        if total % lane == 0:
            return lane
    return None


def base_model_forward(x: jax.Array, *, use_pallas: bool = True) -> jax.Array:
    """Pallas implementation of BaseModel's (abstract) forward: identity.

    The truly fastest path is no kernel at all (`use_pallas=False` just
    returns x).  With `use_pallas=True` the data flows through a real Pallas
    copy kernel, structured as the template a concrete subclass would extend.
    """
    if not use_pallas:
        return x  # zero HBM traffic: the optimal "identity forward".

    shape = x.shape
    total = int(x.size)
    itemsize = jnp.dtype(x.dtype).itemsize
    nbytes = total * itemsize
    lane = _choose_lane_width(total)
    budget, vmem_limit = _vmem_budget_bytes()

    # ---------------- single full-extent block (no grid) -----------------
    if nbytes <= _SINGLE_BLOCK_CUTOFF or lane is None:
        if lane is None and 2 * nbytes > budget:
            # TODO(synk): pad-and-tile path for huge totals not divisible by 128.
            raise NotImplementedError(
                "input too large for a single block and its element count is "
                "not a multiple of 128")
        x2d = x.reshape(total // lane, lane) if lane is not None else x.reshape(total)
        out = pl.pallas_call(
            _copy_kernel,
            out_shape=jax.ShapeDtypeStruct(x2d.shape, x2d.dtype),
            compiler_params=pltpu.CompilerParams(vmem_limit_bytes=vmem_limit),
        )(x2d)
        return out.reshape(shape)

    # ------------------- tiled, pipelined copy path -----------------------
    # Lane-dense slab: cols is a large multiple of 128 regardless of H*W, so
    # every store is a full, unmasked lane write and DMA descriptors stay long.
    cols = lane
    rows = total // lane
    sub = _min_sublane(x.dtype)
    x2d = x.reshape(rows, cols)

    # 4 live tiles (input + output, each double-buffered) must fit the budget.
    tile_bytes = budget // 4
    row_bytes = cols * itemsize
    tile_r = max(sub, (tile_bytes // row_bytes) // sub * sub)
    tile_r = min(tile_r, max(sub, (rows // sub) * sub))
    # Keep at least 2 grid steps when possible so the 2 TensorCores on v7x
    # both get work (a harmless serial loop on single-core v5e/v6e).
    if pl.cdiv(rows, tile_r) < 2 and rows >= 2 * sub:
        half = (rows + 1) // 2
        tile_r = max(sub, (half // sub) * sub)

    grid = (pl.cdiv(rows, tile_r),)
    out2d = pl.pallas_call(
        _copy_kernel,
        out_shape=jax.ShapeDtypeStruct((rows, cols), x2d.dtype),
        grid_spec=pl.GridSpec(
            grid=grid,
            in_specs=[pl.BlockSpec((tile_r, cols), lambda i: (i, 0))],
            out_specs=pl.BlockSpec((tile_r, cols), lambda i: (i, 0)),
        ),
        compiler_params=pltpu.CompilerParams(
            dimension_semantics=("parallel",),
            vmem_limit_bytes=vmem_limit,
        ),
    )(x2d)
    return out2d.reshape(shape)


def trainable_parameter_count() -> int:
    # Mirrors BaseModel.__str__: BaseModel itself registers no parameters.
    return 0


if __name__ == "__main__":
    key = jax.random.PRNGKey(0)
    k1, k2 = jax.random.split(key)

    # Small NCHW conv-style input (single-block path): batch=2, channels=4, 16x16.
    x_small = jax.random.normal(k1, (2, 4, 16, 16), dtype=jnp.float32)
    y_small = jax.block_until_ready(base_model_forward(x_small))
    assert y_small.shape == x_small.shape and y_small.dtype == x_small.dtype
    assert bool(jnp.allclose(y_small, x_small)), "single-block identity mismatch"

    # 8 MiB input to exercise the tiled, pipelined, megacore-shardable path.
    x_big = jax.random.normal(k2, (16, 8, 128, 128), dtype=jnp.float32)
    y_big = jax.block_until_ready(base_model_forward(x_big))
    assert y_big.shape == x_big.shape and y_big.dtype == x_big.dtype
    assert bool(jnp.allclose(y_big, x_big)), "tiled identity mismatch"

    assert trainable_parameter_count() == 0
    print("KERNEL_OK")
</pallas_src>

<mosaic_0001>
module attributes {stable_mosaic.version = 11 : i64} {
  func.func @_copy_kernel(%arg0: memref<1x2048xf32, #tpu.memory_space<vmem>>, %arg1: memref<1x2048xf32, #tpu.memory_space<vmem>>) attributes {dimension_semantics = [], scalar_prefetch = 0 : i64, scratch_operands = 0 : i64, tpu.core_type = #tpu.core_type<tc>} {
    %c0 = arith.constant 0 : index
    %c0_0 = arith.constant 0 : index
    %0 = vector.load %arg0[%c0, %c0_0] : memref<1x2048xf32, #tpu.memory_space<vmem>>, vector<1x2048xf32>
    %c0_1 = arith.constant 0 : index
    %c0_2 = arith.constant 0 : index
    %1 = vector.load %arg1[%c0_1, %c0_2] : memref<1x2048xf32, #tpu.memory_space<vmem>>, vector<1x2048xf32>
    tpu.vector_store %arg1[%c0_1, %c0_2], %0 {strides = array<i32>} : memref<1x2048xf32, #tpu.memory_space<vmem>>, vector<1x2048xf32>,
    return
  }
}

</mosaic_0001>

<llo_original>
// kernel: tpu_custom_call.1
$region0: #{tpu_custom_call.1}
  #allocation0 [shape = 'u32[]', space=smem, size = 0x4, offset = 0x4, fixed_abs, tag = 'smem constant byte address 0x4 - core index']
  #allocation1 [shape = 'u32[144,128]{1,0:T(1,128)}', space=vmem, size = 0x12000, scoped, tag = 'internal scratch']
  %s0 = inlined_call_operand.hbm [shape: f32[1,2048], index: 0, kind: input, shape index: {}]
  %s1 = inlined_call_operand.hbm [shape: f32[1,2048], index: 1, kind: output, shape index: {}]
  %s2 = sld [smem:[#allocation0]]
  $region18: #{tpu_custom_call.1} parent=0
    _
  %s4 = ssub.s32 1, %s2
  %s5 = scalar_select 0, %s4, %s2
  $region1: #{tpu_custom_call.1} parent=0
    #allocation2 [shape = 'u8[8192]{0}', space=vmem, size = 0x2000, scoped, tag = 'input window, operand 0, single buffered']
    #allocation3 [shape = 's32[1]{0}', space=sflag, size = 0x4, scoped, tag = 'scoped memory for tpu_custom_call.1']
    #allocation4 [shape = 's32[1]{0}', space=sflag, size = 0x4, scoped, tag = 'scoped memory for tpu_custom_call.1']
    #allocation5 [shape = 'u8[8192]{0}', space=vmem, size = 0x2000, scoped, tag = 'output window, operand 0, single buffered']
    %6 = vsyncpa [#allocation3], 0
    %7 = vsyncpa [#allocation4], 0
    // Predicated region
    $region2: #{tpu_custom_call.1} parent=1 // pred_check
      _
    $region3: #{tpu_custom_call.1} parent=1 // pred_check_branch
      %9 = sbr.rel (0) target = $region5
    $region4: #{tpu_custom_call.1} parent=1 // pred_region
      %s11 = ssub.s32 256, 256
      %12 = vsyncadd [#allocation3], %s11
      %s14 = sshll.u32 [#allocation2], 4
      %s15 = int_to_ptr.vmem [resolvable:$true] %s14
      %17 = dma.hbm_to_vmem [thread:$0]  %s0, 256, %s15, [#allocation3]
    $region5: #{tpu_custom_call.1} parent=1 // pred_fallthru
      _
    // Predicated region
    $region6: #{tpu_custom_call.1} parent=1 // pred_check
      _
    $region7: #{tpu_custom_call.1} parent=1 // pred_check_branch
      %19 = sbr.rel (0) target = $region9
    $region8: #{tpu_custom_call.1} parent=1 // pred_region
      %20 = dma.done [#allocation3], 256
    $region9: #{tpu_custom_call.1} parent=1 // pred_fallthru
      _
    %v21 = vld [vmem:[#allocation2] sm:$0xff]
    %v22 = vld [vmem:[#allocation2 + $0x8] sm:$0xff]
    %23 = vst [vmem:[#allocation5] sm:$0xff] %v21
    %24 = vst [vmem:[#allocation5 + $0x8] sm:$0xff] %v22
    // Predicated region
    $region10: #{tpu_custom_call.1} parent=1 // pred_check
      _
    $region11: #{tpu_custom_call.1} parent=1 // pred_check_branch
      %26 = sbr.rel (0) target = $region13
    $region12: #{tpu_custom_call.1} parent=1 // pred_region
      %s28 = ssub.s32 256, 256
      %29 = vsyncadd [#allocation4], %s28
      %s31 = sshll.u32 [#allocation5], 4
      %s32 = int_to_ptr.vmem [resolvable:$true] %s31
      %34 = dma.vmem_to_hbm [thread:$0]  %s32, 256, %s1, [#allocation4]
    $region13: #{tpu_custom_call.1} parent=1 // pred_fallthru
      _
    // Predicated region
    $region14: #{tpu_custom_call.1} parent=1 // pred_check
      _
    $region15: #{tpu_custom_call.1} parent=1 // pred_check_branch
      %36 = sbr.rel (0) target = $region17
    $region16: #{tpu_custom_call.1} parent=1 // pred_region
      %37 = dma.done [#allocation4], 256
    $region17: #{tpu_custom_call.1} parent=1 // pred_fallthru
      _
    %38 = vsyncpa [#allocation3], 1
    %39 = vsyncpa [#allocation4], 1

</llo_original>
